<compile_context>
chip_gen: v7x
topology: tpu7x:2x2x1
jax: 0.10.0
libtpu: 0.0.40
codegen_flags: <defaults>
</compile_context>

<pallas_src>
import jax
import jax.numpy as jnp
from jax.experimental import pallas as pl
from jax.experimental.pallas import tpu as pltpu

HIDDEN_SIZE = 256
INPUT_SIZE = 8
OUTPUT_SIZE = 1


def _round8(n: int) -> int:
    return ((n + 7) // 8) * 8


def _leaky_relu(x, slope=0.2):
    return jnp.where(x > 0, x, slope * x)


def discriminator_kernel(x_ref, w1_ref, b1_ref, w2_ref, b2_ref, w3_ref, b3_ref,
                         o_ref):
    # One batch tile per grid step.  Weights/biases use a constant block index
    # across the grid, so Pallas keeps them VMEM-resident (no per-step re-DMA).
    x = x_ref[...]                                            # (TB, 8) bf16

    # Layer 1 + 2 on the MXU (bf16 operands, f32 accumulation).
    h1 = jnp.dot(x, w1_ref[...], preferred_element_type=jnp.float32)
    h1 = _leaky_relu(h1 + b1_ref[...])                        # f32 on the VPU

    h2 = jnp.dot(h1.astype(jnp.bfloat16), w2_ref[...],
                 preferred_element_type=jnp.float32)
    h2 = _leaky_relu(h2 + b2_ref[...])                        # (TB, 256) f32

    # Layer 3 (256 -> 1): VPU multiply by the broadcast w3 row + XLU
    # cross-lane sum.  Produces (TB, 1) directly — no padded MXU pass.
    z3 = jnp.sum(h2 * w3_ref[...], axis=-1, keepdims=True) + b3_ref[...]

    # Overflow-safe sigmoid via EUP tanh, only on the real output column.
    o_ref[...] = 0.5 * jnp.tanh(0.5 * z3) + 0.5


def prepare_params(params):
    """One-time weight prep (hoisted out of the forward path).

    Returns ready-to-DMA kernel operands: bf16 matmul weights, f32 biases,
    and w3 reshaped to a (1, HIDDEN) row for the in-kernel VPU broadcast.
    """
    return {
        "w1": params["w1"].astype(jnp.bfloat16),                       # (8, 256)
        "b1": params["b1"].astype(jnp.float32).reshape(1, HIDDEN_SIZE),
        "w2": params["w2"].astype(jnp.bfloat16),                       # (256, 256)
        "b2": params["b2"].astype(jnp.float32).reshape(1, HIDDEN_SIZE),
        "w3": params["w3"].astype(jnp.float32).reshape(1, HIDDEN_SIZE),  # row
        "b3": params["b3"].astype(jnp.float32).reshape(1, OUTPUT_SIZE),
    }


def discriminator_forward(x, prepped, *, tb=1024):
    """x: (B, INPUT_SIZE).  prepped: output of prepare_params().  Returns (B, 1) f32."""
    B = x.shape[0]
    B8 = _round8(B)

    # Batch tile: multiple of 8 sublanes, capped by the (padded) batch.
    TB = min(_round8(max(tb, 8)), B8)
    # Prefer >=2 grid steps so the "parallel" batch axis can shard across
    # v7x's 2 TensorCores (no-op on v5e/v6e, harmless for tiny batches).
    if B8 >= 16 and (B8 // TB) < 2:
        TB = min(_round8((B8 + 1) // 2), B8)

    B_pad = pl.cdiv(B8, TB) * TB
    xp = x.astype(jnp.bfloat16)                 # halve input HBM traffic
    if B_pad != B:
        xp = jnp.pad(xp, ((0, B_pad - B), (0, 0)))

    resident = lambda shape: pl.BlockSpec(shape, lambda i: (0, 0))

    out = pl.pallas_call(
        discriminator_kernel,
        out_shape=jax.ShapeDtypeStruct((B_pad, OUTPUT_SIZE), jnp.float32),
        grid=(B_pad // TB,),
        in_specs=[
            pl.BlockSpec((TB, INPUT_SIZE), lambda i: (i, 0)),
            resident(prepped["w1"].shape), resident(prepped["b1"].shape),
            resident(prepped["w2"].shape), resident(prepped["b2"].shape),
            resident(prepped["w3"].shape), resident(prepped["b3"].shape),
        ],
        out_specs=pl.BlockSpec((TB, OUTPUT_SIZE), lambda i: (i, 0)),
        compiler_params=pltpu.CompilerParams(
            dimension_semantics=("parallel",)),
    )(xp, prepped["w1"], prepped["b1"], prepped["w2"], prepped["b2"],
      prepped["w3"], prepped["b3"])

    return out[:B]


def init_params(key):
    """Deterministic synthetic init.  Weights stored as (in, out), f32."""
    ks = jax.random.split(key, 6)
    scale = 0.05
    w1 = scale * jax.random.normal(ks[0], (INPUT_SIZE, HIDDEN_SIZE), jnp.float32)
    b1 = scale * jax.random.normal(ks[1], (1, HIDDEN_SIZE), jnp.float32)
    w2 = scale * jax.random.normal(ks[2], (HIDDEN_SIZE, HIDDEN_SIZE), jnp.float32)
    b2 = scale * jax.random.normal(ks[3], (1, HIDDEN_SIZE), jnp.float32)
    w3 = scale * jax.random.normal(ks[4], (HIDDEN_SIZE, OUTPUT_SIZE), jnp.float32)
    b3 = scale * jax.random.normal(ks[5], (1, OUTPUT_SIZE), jnp.float32)
    return {"w1": w1, "b1": b1, "w2": w2, "b2": b2, "w3": w3, "b3": b3}


def reference_forward(x, p):
    """Pure-JAX reference mirroring the kernel's quantization points."""
    f32 = jnp.float32
    hp = jax.lax.Precision.HIGHEST
    q = lambda a: a.astype(jnp.bfloat16).astype(f32)
    z1 = jnp.dot(q(x), q(p["w1"]), precision=hp) + p["b1"]
    h1 = jnp.where(z1 > 0, z1, 0.2 * z1)
    z2 = jnp.dot(q(h1), q(p["w2"]), precision=hp) + p["b2"]
    h2 = jnp.where(z2 > 0, z2, 0.2 * z2)
    z3 = jnp.dot(h2, p["w3"], precision=hp) + p["b3"]      # layer 3 is f32 in-kernel
    return jax.nn.sigmoid(z3)


if __name__ == "__main__":
    key = jax.random.PRNGKey(0)
    k_x, k_p, k_x2 = jax.random.split(key, 3)
    params = init_params(k_p)
    prepped = prepare_params(params)

    # Small batch (single tile).
    B = 8
    x = jax.random.normal(k_x, (B, INPUT_SIZE), jnp.float32)
    out = jax.block_until_ready(discriminator_forward(x, prepped))
    ref = reference_forward(x, params)
    assert out.shape == (B, OUTPUT_SIZE), out.shape
    assert jnp.allclose(out, ref, atol=1e-3, rtol=1e-3), (out, ref)

    # Batch not a multiple of the tile (exercises padding, slice-back, and the
    # TB rounding / >=2-step logic).
    B2 = 40
    x2 = jax.random.normal(k_x2, (B2, INPUT_SIZE), jnp.float32)
    out2 = jax.block_until_ready(discriminator_forward(x2, prepped, tb=16))
    ref2 = reference_forward(x2, params)
    assert out2.shape == (B2, OUTPUT_SIZE), out2.shape
    assert jnp.allclose(out2, ref2, atol=1e-3, rtol=1e-3), (out2, ref2)

    print("KERNEL_OK")
</pallas_src>

<mosaic_0001>
module attributes {stable_mosaic.version = 11 : i64} {
  func.func @discriminator_kernel(%arg0: i32, %arg1: memref<8x8xbf16, #tpu.memory_space<vmem>>, %arg2: memref<8x256xbf16, #tpu.memory_space<vmem>>, %arg3: memref<1x256xf32, #tpu.memory_space<vmem>>, %arg4: memref<256x256xbf16, #tpu.memory_space<vmem>>, %arg5: memref<1x256xf32, #tpu.memory_space<vmem>>, %arg6: memref<1x256xf32, #tpu.memory_space<vmem>>, %arg7: memref<1x1xf32, #tpu.memory_space<vmem>>, %arg8: memref<8x1xf32, #tpu.memory_space<vmem>>) attributes {dimension_semantics = [#tpu.dimension_semantics<parallel>], iteration_bounds = array<i64: 1>, scalar_prefetch = 0 : i64, scratch_operands = 0 : i64, tpu.core_type = #tpu.core_type<tc>, window_params = [{transform_indices = @transform_0, window_bounds = array<i64: 8, 8>}, {pipeline_mode = #tpu.pipeline_mode<synchronous>, transform_indices = @transform_1, window_bounds = array<i64: 8, 256>}, {pipeline_mode = #tpu.pipeline_mode<synchronous>, transform_indices = @transform_2, window_bounds = array<i64: 1, 256>}, {pipeline_mode = #tpu.pipeline_mode<synchronous>, transform_indices = @transform_3, window_bounds = array<i64: 256, 256>}, {pipeline_mode = #tpu.pipeline_mode<synchronous>, transform_indices = @transform_4, window_bounds = array<i64: 1, 256>}, {pipeline_mode = #tpu.pipeline_mode<synchronous>, transform_indices = @transform_5, window_bounds = array<i64: 1, 256>}, {pipeline_mode = #tpu.pipeline_mode<synchronous>, transform_indices = @transform_6, window_bounds = array<i64: 1, 1>}, {transform_indices = @transform_7, window_bounds = array<i64: 8, 1>}]} {
    %c0 = arith.constant 0 : index
    %c0_0 = arith.constant 0 : index
    %0 = vector.load %arg1[%c0, %c0_0] : memref<8x8xbf16, #tpu.memory_space<vmem>>, vector<8x8xbf16>
    %c0_1 = arith.constant 0 : index
    %c0_2 = arith.constant 0 : index
    %1 = vector.load %arg2[%c0_1, %c0_2] : memref<8x256xbf16, #tpu.memory_space<vmem>>, vector<8x256xbf16>
    %cst = arith.constant dense<0.000000e+00> : vector<8x256xf32>
    %2 = tpu.matmul %0, %1, %cst {dimension_numbers = #tpu.dot_dimension_numbers<[1], [0], [0], [1], [0, 0, 1, 1], [], []>} : vector<8x8xbf16>, vector<8x256xbf16>, vector<8x256xf32> -> vector<8x256xf32>
    %c0_3 = arith.constant 0 : index
    %c0_4 = arith.constant 0 : index
    %3 = vector.load %arg3[%c0_3, %c0_4] : memref<1x256xf32, #tpu.memory_space<vmem>>, vector<1x256xf32>
    %4 = vector.broadcast %3 : vector<1x256xf32> to vector<8x256xf32>
    %5 = arith.addf %2, %4 : vector<8x256xf32>
    %cst_5 = arith.constant 0.000000e+00 : f32
    %6 = vector.broadcast %cst_5 : f32 to vector<8x256xf32>
    %7 = arith.cmpf ogt, %5, %6 : vector<8x256xf32>
    %cst_6 = arith.constant 2.000000e-01 : f32
    %8 = vector.broadcast %cst_6 : f32 to vector<8x256xf32>
    %9 = arith.mulf %8, %5 : vector<8x256xf32>
    %10 = arith.select %7, %5, %9 : vector<8x256xi1>, vector<8x256xf32>
    %11 = arith.truncf %10 : vector<8x256xf32> to vector<8x256xbf16>
    %c0_7 = arith.constant 0 : index
    %c0_8 = arith.constant 0 : index
    %12 = vector.load %arg4[%c0_7, %c0_8] : memref<256x256xbf16, #tpu.memory_space<vmem>>, vector<256x256xbf16>
    %cst_9 = arith.constant dense<0.000000e+00> : vector<8x256xf32>
    %13 = tpu.matmul %11, %12, %cst_9 {dimension_numbers = #tpu.dot_dimension_numbers<[1], [0], [0], [1], [0, 0, 1, 1], [], []>} : vector<8x256xbf16>, vector<256x256xbf16>, vector<8x256xf32> -> vector<8x256xf32>
    %c0_10 = arith.constant 0 : index
    %c0_11 = arith.constant 0 : index
    %14 = vector.load %arg5[%c0_10, %c0_11] : memref<1x256xf32, #tpu.memory_space<vmem>>, vector<1x256xf32>
    %15 = vector.broadcast %14 : vector<1x256xf32> to vector<8x256xf32>
    %16 = arith.addf %13, %15 : vector<8x256xf32>
    %cst_12 = arith.constant 0.000000e+00 : f32
    %17 = vector.broadcast %cst_12 : f32 to vector<8x256xf32>
    %18 = arith.cmpf ogt, %16, %17 : vector<8x256xf32>
    %cst_13 = arith.constant 2.000000e-01 : f32
    %19 = vector.broadcast %cst_13 : f32 to vector<8x256xf32>
    %20 = arith.mulf %19, %16 : vector<8x256xf32>
    %21 = arith.select %18, %16, %20 : vector<8x256xi1>, vector<8x256xf32>
    %c0_14 = arith.constant 0 : index
    %c0_15 = arith.constant 0 : index
    %22 = vector.load %arg6[%c0_14, %c0_15] : memref<1x256xf32, #tpu.memory_space<vmem>>, vector<1x256xf32>
    %23 = vector.broadcast %22 : vector<1x256xf32> to vector<8x256xf32>
    %24 = arith.mulf %21, %23 : vector<8x256xf32>
    %cst_16 = arith.constant dense<0.000000e+00> : vector<8xf32>
    %25 = vector.multi_reduction <add>, %24, %cst_16 [1] : vector<8x256xf32> to vector<8xf32>
    %26 = vector.shape_cast %25 : vector<8xf32> to vector<8x1xf32>
    %c0_17 = arith.constant 0 : index
    %c0_18 = arith.constant 0 : index
    %27 = vector.load %arg7[%c0_17, %c0_18] : memref<1x1xf32, #tpu.memory_space<vmem>>, vector<1x1xf32>
    %28 = vector.broadcast %27 : vector<1x1xf32> to vector<8x1xf32>
    %29 = arith.addf %26, %28 : vector<8x1xf32>
    %cst_19 = arith.constant 5.000000e-01 : f32
    %30 = vector.broadcast %cst_19 : f32 to vector<8x1xf32>
    %31 = arith.mulf %30, %29 : vector<8x1xf32>
    %32 = math.tanh %31 : vector<8x1xf32>
    %cst_20 = arith.constant 5.000000e-01 : f32
    %33 = vector.broadcast %cst_20 : f32 to vector<8x1xf32>
    %34 = arith.mulf %33, %32 : vector<8x1xf32>
    %cst_21 = arith.constant 5.000000e-01 : f32
    %35 = vector.broadcast %cst_21 : f32 to vector<8x1xf32>
    %36 = arith.addf %34, %35 : vector<8x1xf32>
    %c0_22 = arith.constant 0 : index
    %c0_23 = arith.constant 0 : index
    %37 = vector.load %arg8[%c0_22, %c0_23] : memref<8x1xf32, #tpu.memory_space<vmem>>, vector<8x1xf32>
    tpu.vector_store %arg8[%c0_22, %c0_23], %36 {strides = array<i32>} : memref<8x1xf32, #tpu.memory_space<vmem>>, vector<8x1xf32>,
    return
  }
  func.func @transform_0(%arg0: i32) -> (i32, i32) {
    %c0_i32 = arith.constant 0 : i32
    %c0_i32_0 = arith.constant 0 : i32
    return %arg0, %c0_i32 : i32, i32
  }
  func.func @transform_1(%arg0: i32) -> (i32, i32) {
    %c0_i32 = arith.constant 0 : i32
    %c0_i32_0 = arith.constant 0 : i32
    %c0_i32_1 = arith.constant 0 : i32
    return %c0_i32, %c0_i32_0 : i32, i32
  }
  func.func @transform_2(%arg0: i32) -> (i32, i32) {
    %c0_i32 = arith.constant 0 : i32
    %c0_i32_0 = arith.constant 0 : i32
    %c0_i32_1 = arith.constant 0 : i32
    return %c0_i32, %c0_i32_0 : i32, i32
  }
  func.func @transform_3(%arg0: i32) -> (i32, i32) {
    %c0_i32 = arith.constant 0 : i32
    %c0_i32_0 = arith.constant 0 : i32
    %c0_i32_1 = arith.constant 0 : i32
    return %c0_i32, %c0_i32_0 : i32, i32
  }
  func.func @transform_4(%arg0: i32) -> (i32, i32) {
    %c0_i32 = arith.constant 0 : i32
    %c0_i32_0 = arith.constant 0 : i32
    %c0_i32_1 = arith.constant 0 : i32
    return %c0_i32, %c0_i32_0 : i32, i32
  }
  func.func @transform_5(%arg0: i32) -> (i32, i32) {
    %c0_i32 = arith.constant 0 : i32
    %c0_i32_0 = arith.constant 0 : i32
    %c0_i32_1 = arith.constant 0 : i32
    return %c0_i32, %c0_i32_0 : i32, i32
  }
  func.func @transform_6(%arg0: i32) -> (i32, i32) {
    %c0_i32 = arith.constant 0 : i32
    %c0_i32_0 = arith.constant 0 : i32
    %c0_i32_1 = arith.constant 0 : i32
    return %c0_i32, %c0_i32_0 : i32, i32
  }
  func.func @transform_7(%arg0: i32) -> (i32, i32) {
    %c0_i32 = arith.constant 0 : i32
    %c0_i32_0 = arith.constant 0 : i32
    return %arg0, %c0_i32 : i32, i32
  }
}

</mosaic_0001>

<llo_original>
// kernel: tpu_custom_call.1
$region0: #{tpu_custom_call.1}
  #allocation0 [shape = 'u32[]', space=smem, size = 0x4, offset = 0x4, fixed_abs, tag = 'smem constant byte address 0x4 - core index']
  #allocation1 [shape = 'u32[144,128]{1,0:T(1,128)}', space=vmem, size = 0x12000, scoped, tag = 'internal scratch']
  #allocation2 [shape = 'f32[1,1]{1,0:T(1,128)S(1)}', space=vmem, size = 0x200, scoped, tag = 'scoped memory for tpu_custom_call.1']
  %s0 = inlined_call_operand.hbm [shape: bf16[8,8], index: 0, kind: input, shape index: {}]
  %s1 = inlined_call_operand.hbm [shape: bf16[8,256], index: 1, kind: input, shape index: {}]
  %s2 = inlined_call_operand.vmem [shape: f32[1,256], index: 2, kind: input, shape index: {}]
  %s3 = inlined_call_operand.hbm [shape: bf16[256,256], index: 3, kind: input, shape index: {}]
  %s4 = inlined_call_operand.vmem [shape: f32[1,256], index: 4, kind: input, shape index: {}]
  %s5 = inlined_call_operand.vmem [shape: f32[1,256], index: 5, kind: input, shape index: {}]
  %s6 = inlined_call_operand.<no memory space> [shape: f32[1,1], index: 6, kind: input, shape index: {}]
  %s7 = inlined_call_operand.vmem [shape: f32[8,1], index: 7, kind: output, shape index: {}]
  %s8 = sld [smem:[#allocation0]]
  $region50: #{tpu_custom_call.1} parent=0
    _
  %s10 = ssub.s32 1, %s8
  %s11 = scalar_select 0, %s10, %s8
  %v12 = vstv %s6
  %13 = vst [vmem:[#allocation2] sm:$0x1] %v12
  $region1: #{tpu_custom_call.1} parent=0
    #allocation3 [shape = 'u8[2048]{0}', space=vmem, size = 0x800, scoped, tag = 'input window, operand 0, single buffered']
    #allocation4 [shape = 's32[1]{0}', space=sflag, size = 0x4, scoped, tag = 'scoped memory for tpu_custom_call.1']
    #allocation5 [shape = 'u8[4096]{0}', space=vmem, size = 0x1000, scoped, tag = 'input window, operand 1, single buffered']
    #allocation6 [shape = 's32[1]{0}', space=sflag, size = 0x4, scoped, tag = 'scoped memory for tpu_custom_call.1']
    #allocation7 [shape = 'u8[131072]{0}', space=vmem, size = 0x20000, scoped, tag = 'input window, operand 3, single buffered']
    %14 = vsyncpa [#allocation4], 0
    %15 = vsyncpa [#allocation6], 0
    // Predicated region
    $region2: #{tpu_custom_call.1} parent=1 // pred_check
      _
    $region3: #{tpu_custom_call.1} parent=1 // pred_check_branch
      %17 = sbr.rel (0) target = $region5
    $region4: #{tpu_custom_call.1} parent=1 // pred_region
      %s19 = ssub.s32 64, 64
      %20 = vsyncadd [#allocation4], %s19
      %s22 = sshll.u32 [#allocation3], 4
      %s23 = int_to_ptr.vmem [resolvable:$true] %s22
      %25 = dma.hbm_to_vmem [thread:$0]  %s0, 64, %s23, [#allocation4]
    $region5: #{tpu_custom_call.1} parent=1 // pred_fallthru
      _
    // Predicated region
    $region6: #{tpu_custom_call.1} parent=1 // pred_check
      _
    $region7: #{tpu_custom_call.1} parent=1 // pred_check_branch
      %27 = sbr.rel (0) target = $region9
    $region8: #{tpu_custom_call.1} parent=1 // pred_region
      %s29 = ssub.s32 128, 128
      %30 = vsyncadd [#allocation6], %s29
      %s32 = sshll.u32 [#allocation5], 4
      %s33 = int_to_ptr.vmem [resolvable:$true] %s32
      %35 = dma.hbm_to_vmem [thread:$0]  %s1, 128, %s33, [#allocation6]
    $region9: #{tpu_custom_call.1} parent=1 // pred_fallthru
      _
    // Predicated region
    $region10: #{tpu_custom_call.1} parent=1 // pred_check
      _
    $region11: #{tpu_custom_call.1} parent=1 // pred_check_branch
      %37 = sbr.rel (0) target = $region13
    $region12: #{tpu_custom_call.1} parent=1 // pred_region
      _
    $region13: #{tpu_custom_call.1} parent=1 // pred_fallthru
      _
    // Predicated region
    $region14: #{tpu_custom_call.1} parent=1 // pred_check
      _
    $region15: #{tpu_custom_call.1} parent=1 // pred_check_branch
      %39 = sbr.rel (0) target = $region17
    $region16: #{tpu_custom_call.1} parent=1 // pred_region
      %s41 = ssub.s32 4096, 4096
      %42 = vsyncadd [#allocation6], %s41
      %s43 = sshll.u32 [#allocation7], 4
      %s44 = int_to_ptr.vmem [resolvable:$true] %s43
      %49 = dma.hbm_to_vmem [thread:$0]  %s3, 4096, %s44, [#allocation6], 128, 128, 8
    $region17: #{tpu_custom_call.1} parent=1 // pred_fallthru
      _
    // Predicated region
    $region18: #{tpu_custom_call.1} parent=1 // pred_check
      _
    $region19: #{tpu_custom_call.1} parent=1 // pred_check_branch
      %51 = sbr.rel (0) target = $region21
    $region20: #{tpu_custom_call.1} parent=1 // pred_region
      _
    $region21: #{tpu_custom_call.1} parent=1 // pred_fallthru
      _
    // Predicated region
    $region22: #{tpu_custom_call.1} parent=1 // pred_check
      _
    $region23: #{tpu_custom_call.1} parent=1 // pred_check_branch
      %53 = sbr.rel (0) target = $region25
    $region24: #{tpu_custom_call.1} parent=1 // pred_region
      _
    $region25: #{tpu_custom_call.1} parent=1 // pred_fallthru
      _
    // Predicated region
    $region26: #{tpu_custom_call.1} parent=1 // pred_check
      _
    $region27: #{tpu_custom_call.1} parent=1 // pred_check_branch
      %55 = sbr.rel (0) target = $region29
    $region28: #{tpu_custom_call.1} parent=1 // pred_region
      _
    $region29: #{tpu_custom_call.1} parent=1 // pred_fallthru
      _
    // Predicated region
    $region30: #{tpu_custom_call.1} parent=1 // pred_check
      _
    $region31: #{tpu_custom_call.1} parent=1 // pred_check_branch
      %57 = sbr.rel (0) target = $region33
    $region32: #{tpu_custom_call.1} parent=1 // pred_region
      %58 = dma.done [#allocation4], 64
    $region33: #{tpu_custom_call.1} parent=1 // pred_fallthru
      _
    // Predicated region
    $region34: #{tpu_custom_call.1} parent=1 // pred_check
      _
    $region35: #{tpu_custom_call.1} parent=1 // pred_check_branch
      %60 = sbr.rel (0) target = $region37
    $region36: #{tpu_custom_call.1} parent=1 // pred_region
      %61 = dma.done [#allocation6], 128
    $region37: #{tpu_custom_call.1} parent=1 // pred_fallthru
      _
    // Predicated region
    $region38: #{tpu_custom_call.1} parent=1 // pred_check
      _
    $region39: #{tpu_custom_call.1} parent=1 // pred_check_branch
      %63 = sbr.rel (0) target = $region41
    $region40: #{tpu_custom_call.1} parent=1 // pred_region
      %64 = dma.done [#allocation6], 4096
    $region41: #{tpu_custom_call.1} parent=1 // pred_fallthru
      _
    %v66 = vld [vmem:[#allocation3] sm:$0xf]
    %v67 = vld [vmem:[#allocation5] sm:$0xff]
    %v68 = vld [vmem:[%s2] sm:$0x3]
    %v70 = vlaneseq
    %v71 = vshrl.u32 %v70, 7
    %v72 = vsub.s32 0, %v71
    %v73 = vrot.slane %v68, %v72
    %v74 = vlaneseq
    %v75 = vshrl.u32 %v74, 7
    %v76 = vsub.s32 1, %v75
    %v77 = vrot.slane %v68, %v76
    %v81 = vunpack.c.l.b16 %v67
    %v82 = vunpack.c.h.b16 %v67
    %v83 = vpack.c.b16 %v81, %v81
    %v84 = vpack.c.b16 %v82, %v82
    %vm85 = vcmask 64512
    %v87 = vsel %vm85, %v66, 0
    %vm89 = vcmask 1043456
    %v91 = vsel %vm89, %v83, 0
    %v94 = vsel %vm89, %v84, 0
    %96 = vmatprep.subr.bf16.mxu0 %v94
    %97 = vmatpush1.bf16.msra.mxu0 %v91
    %98 = vmatprep.subr.bf16.mxu0 0
    %99 = vmatpush1.bf16.msra.mxu0 0
    %100 = vmatprep.subr.bf16.mxu0 0
    %101 = vmatpush1.bf16.msra.mxu0 0
    %102 = vmatprep.subr.bf16.mxu0 0
    %103 = vmatpush1.bf16.msra.mxu0 0
    %104 = vmatprep.subr.bf16.mxu0 0
    %105 = vmatpush1.bf16.msra.mxu0 0
    %106 = vmatprep.subr.bf16.mxu0 0
    %107 = vmatpush1.bf16.msra.mxu0 0
    %108 = vmatprep.subr.bf16.mxu0 0
    %109 = vmatpush1.bf16.msra.mxu0 0
    %110 = vmatprep.subr.bf16.mxu0 0
    %111 = vmatpush1.bf16.msra.mxu0 0
    %112 = vmatprep.subr.bf16.mxu0 0
    %113 = vmatpush1.bf16.msra.mxu0 0
    %114 = vmatprep.subr.bf16.mxu0 0
    %115 = vmatpush1.bf16.msra.mxu0 0
    %116 = vmatprep.subr.bf16.mxu0 0
    %117 = vmatpush1.bf16.msra.mxu0 0
    %118 = vmatprep.subr.bf16.mxu0 0
    %119 = vmatpush1.bf16.msra.mxu0 0
    %120 = vmatprep.subr.bf16.mxu0 0
    %121 = vmatpush1.bf16.msra.mxu0 0
    %122 = vmatprep.subr.bf16.mxu0 0
    %123 = vmatpush1.bf16.msra.mxu0 0
    %124 = vmatprep.subr.bf16.mxu0 0
    %125 = vmatpush1.bf16.msra.mxu0 0
    %126 = vmatprep.subr.bf16.mxu0 0
    %127 = vmatpush1.bf16.msra.mxu0 0
    %128 = vmatprep.mubr.bf16.mxu0 0
    %129 = vmatmul.mubr.bf16.gmra.mrb[0].mxu0 %v87
    %v130 = vpop.f32.mrb[0].mxu0
    %v131 = vadd.f32 %v73, %v130
    %v132 = vpop.f32.mrb[0].mxu0
    %v133 = vadd.f32 %v77, %v132
    %v134 = vpop.f32.mrb[0].mxu0
    %v135 = vpop.f32.mrb[0].mxu0
    %136 = vdwg.mxu0
    %vm137 = vcmp.gt.f32.partialorder %v131, 0.0
    %vm138 = vcmp.gt.f32.partialorder %v133, 0.0
    %v139 = vmul.f32 %v131, 0.2
    %v140 = vmul.f32 %v133, 0.2
    %v141 = vsel %vm137, %v131, %v139
    %v142 = vsel %vm138, %v133, %v140
    %v143 = vpack.c.bf16 %v141, %v141
    %v144 = vpack.c.bf16 %v142, %v142
    %v145 = vld [vmem:[#allocation7] sm:$0xff]
    %v146 = vld [vmem:[#allocation7 + $0x8] sm:$0xff]
    %v147 = vld [vmem:[#allocation7 + $0x10] sm:$0xff]
    %v148 = vld [vmem:[#allocation7 + $0x18] sm:$0xff]
    %v149 = vld [vmem:[#allocation7 + $0x20] sm:$0xff]
    %v150 = vld [vmem:[#allocation7 + $0x28] sm:$0xff]
    %v151 = vld [vmem:[#allocation7 + $0x30] sm:$0xff]
    %v152 = vld [vmem:[#allocation7 + $0x38] sm:$0xff]
    %v153 = vld [vmem:[#allocation7 + $0x40] sm:$0xff]
    %v154 = vld [vmem:[#allocation7 + $0x48] sm:$0xff]
    %v155 = vld [vmem:[#allocation7 + $0x50] sm:$0xff]
    %v156 = vld [vmem:[#allocation7 + $0x58] sm:$0xff]
    %v157 = vld [vmem:[#allocation7 + $0x60] sm:$0xff]
    %v158 = vld [vmem:[#allocation7 + $0x68] sm:$0xff]
    %v159 = vld [vmem:[#allocation7 + $0x70] sm:$0xff]
    %v160 = vld [vmem:[#allocation7 + $0x78] sm:$0xff]
    %v161 = vld [vmem:[#allocation7 + $0x80] sm:$0xff]
    %v162 = vld [vmem:[#allocation7 + $0x88] sm:$0xff]
    %v163 = vld [vmem:[#allocation7 + $0x90] sm:$0xff]
    %v164 = vld [vmem:[#allocation7 + $0x98] sm:$0xff]
    %v165 = vld [vmem:[#allocation7 + $0xa0] sm:$0xff]
    %v166 = vld [vmem:[#allocation7 + $0xa8] sm:$0xff]
    %v167 = vld [vmem:[#allocation7 + $0xb0] sm:$0xff]
    %v168 = vld [vmem:[#allocation7 + $0xb8] sm:$0xff]
    %v169 = vld [vmem:[#allocation7 + $0xc0] sm:$0xff]
    %v170 = vld [vmem:[#allocation7 + $0xc8] sm:$0xff]
    %v171 = vld [vmem:[#allocation7 + $0xd0] sm:$0xff]
    %v172 = vld [vmem:[#allocation7 + $0xd8] sm:$0xff]
    %v173 = vld [vmem:[#allocation7 + $0xe0] sm:$0xff]
    %v174 = vld [vmem:[#allocation7 + $0xe8] sm:$0xff]
    %v175 = vld [vmem:[#allocation7 + $0xf0] sm:$0xff]
    %v176 = vld [vmem:[#allocation7 + $0xf8] sm:$0xff]
    %v177 = vld [vmem:[%s4] sm:$0x3]
    %v179 = vlaneseq
    %v180 = vshrl.u32 %v179, 7
    %v181 = vsub.s32 0, %v180
    %v182 = vrot.slane %v177, %v181
    %v183 = vlaneseq
    %v184 = vshrl.u32 %v183, 7
    %v185 = vsub.s32 1, %v184
    %v186 = vrot.slane %v177, %v185
    %v221 = vunpack.c.l.b16 %v145
    %v222 = vunpack.c.h.b16 %v145
    %v223 = vunpack.c.l.b16 %v146
    %v224 = vunpack.c.h.b16 %v146
    %v225 = vunpack.c.l.b16 %v147
    %v226 = vunpack.c.h.b16 %v147
    %v227 = vunpack.c.l.b16 %v148
    %v228 = vunpack.c.h.b16 %v148
    %v229 = vunpack.c.l.b16 %v149
    %v230 = vunpack.c.h.b16 %v149
    %v231 = vunpack.c.l.b16 %v150
    %v232 = vunpack.c.h.b16 %v150
    %v233 = vunpack.c.l.b16 %v151
    %v234 = vunpack.c.h.b16 %v151
    %v235 = vunpack.c.l.b16 %v152
    %v236 = vunpack.c.h.b16 %v152
    %v237 = vunpack.c.l.b16 %v153
    %v238 = vunpack.c.h.b16 %v153
    %v239 = vunpack.c.l.b16 %v154
    %v240 = vunpack.c.h.b16 %v154
    %v241 = vunpack.c.l.b16 %v155
    %v242 = vunpack.c.h.b16 %v155
    %v243 = vunpack.c.l.b16 %v156
    %v244 = vunpack.c.h.b16 %v156
    %v245 = vunpack.c.l.b16 %v157
    %v246 = vunpack.c.h.b16 %v157
    %v247 = vunpack.c.l.b16 %v158
    %v248 = vunpack.c.h.b16 %v158
    %v249 = vunpack.c.l.b16 %v159
    %v250 = vunpack.c.h.b16 %v159
    %v251 = vunpack.c.l.b16 %v160
    %v252 = vunpack.c.h.b16 %v160
    %v253 = vunpack.c.l.b16 %v161
    %v254 = vunpack.c.h.b16 %v161
    %v255 = vunpack.c.l.b16 %v162
    %v256 = vunpack.c.h.b16 %v162
    %v257 = vunpack.c.l.b16 %v163
    %v258 = vunpack.c.h.b16 %v163
    %v259 = vunpack.c.l.b16 %v164
    %v260 = vunpack.c.h.b16 %v164
    %v261 = vunpack.c.l.b16 %v165
    %v262 = vunpack.c.h.b16 %v165
    %v263 = vunpack.c.l.b16 %v166
    %v264 = vunpack.c.h.b16 %v166
    %v265 = vunpack.c.l.b16 %v167
    %v266 = vunpack.c.h.b16 %v167
    %v267 = vunpack.c.l.b16 %v168
    %v268 = vunpack.c.h.b16 %v168
    %v269 = vunpack.c.l.b16 %v169
    %v270 = vunpack.c.h.b16 %v169
    %v271 = vunpack.c.l.b16 %v170
    %v272 = vunpack.c.h.b16 %v170
    %v273 = vunpack.c.l.b16 %v171
    %v274 = vunpack.c.h.b16 %v171
    %v275 = vunpack.c.l.b16 %v172
    %v276 = vunpack.c.h.b16 %v172
    %v277 = vunpack.c.l.b16 %v173
    %v278 = vunpack.c.h.b16 %v173
    %v279 = vunpack.c.l.b16 %v174
    %v280 = vunpack.c.h.b16 %v174
    %v281 = vunpack.c.l.b16 %v175
    %v282 = vunpack.c.h.b16 %v175
    %v283 = vunpack.c.l.b16 %v176
    %v284 = vunpack.c.h.b16 %v176
    %v285 = vpack.c.b16 %v223, %v221
    %v286 = vpack.c.b16 %v224, %v222
    %v287 = vpack.c.b16 %v227, %v225
    %v288 = vpack.c.b16 %v228, %v226
    %v289 = vpack.c.b16 %v231, %v229
    %v290 = vpack.c.b16 %v232, %v230
    %v291 = vpack.c.b16 %v235, %v233
    %v292 = vpack.c.b16 %v236, %v234
    %v293 = vpack.c.b16 %v239, %v237
    %v294 = vpack.c.b16 %v240, %v238
    %v295 = vpack.c.b16 %v243, %v241
    %v296 = vpack.c.b16 %v244, %v242
    %v297 = vpack.c.b16 %v247, %v245
    %v298 = vpack.c.b16 %v248, %v246
    %v299 = vpack.c.b16 %v251, %v249
    %v300 = vpack.c.b16 %v252, %v250
    %v301 = vpack.c.b16 %v255, %v253
    %v302 = vpack.c.b16 %v256, %v254
    %v303 = vpack.c.b16 %v259, %v257
    %v304 = vpack.c.b16 %v260, %v258
    %v305 = vpack.c.b16 %v263, %v261
    %v306 = vpack.c.b16 %v264, %v262
    %v307 = vpack.c.b16 %v267, %v265
    %v308 = vpack.c.b16 %v268, %v266
    %v309 = vpack.c.b16 %v271, %v269
    %v310 = vpack.c.b16 %v272, %v270
    %v311 = vpack.c.b16 %v275, %v273
    %v312 = vpack.c.b16 %v276, %v274
    %v313 = vpack.c.b16 %v279, %v277
    %v314 = vpack.c.b16 %v280, %v278
    %v315 = vpack.c.b16 %v283, %v281
    %v316 = vpack.c.b16 %v284, %v282
    %349 = vmatprep.subr.bf16.mxu0 %v286
    %350 = vmatpush1.bf16.msra.mxu0 %v285
    %351 = vmatprep.subr.bf16.mxu0 %v288
    %352 = vmatpush1.bf16.msra.mxu0 %v287
    %353 = vmatprep.subr.bf16.mxu0 %v290
    %354 = vmatpush1.bf16.msra.mxu0 %v289
    %355 = vmatprep.subr.bf16.mxu0 %v292
    %356 = vmatpush1.bf16.msra.mxu0 %v291
    %357 = vmatprep.subr.bf16.mxu0 %v294
    %358 = vmatpush1.bf16.msra.mxu0 %v293
    %359 = vmatprep.subr.bf16.mxu0 %v296
    %360 = vmatpush1.bf16.msra.mxu0 %v295
    %361 = vmatprep.subr.bf16.mxu0 %v298
    %362 = vmatpush1.bf16.msra.mxu0 %v297
    %363 = vmatprep.subr.bf16.mxu0 %v300
    %364 = vmatpush1.bf16.msra.mxu0 %v299
    %365 = vmatprep.subr.bf16.mxu0 %v302
    %366 = vmatpush1.bf16.msra.mxu0 %v301
    %367 = vmatprep.subr.bf16.mxu0 %v304
    %368 = vmatpush1.bf16.msra.mxu0 %v303
    %369 = vmatprep.subr.bf16.mxu0 %v306
    %370 = vmatpush1.bf16.msra.mxu0 %v305
    %371 = vmatprep.subr.bf16.mxu0 %v308
    %372 = vmatpush1.bf16.msra.mxu0 %v307
    %373 = vmatprep.subr.bf16.mxu0 %v310
    %374 = vmatpush1.bf16.msra.mxu0 %v309
    %375 = vmatprep.subr.bf16.mxu0 %v312
    %376 = vmatpush1.bf16.msra.mxu0 %v311
    %377 = vmatprep.subr.bf16.mxu0 %v314
    %378 = vmatpush1.bf16.msra.mxu0 %v313
    %379 = vmatprep.subr.bf16.mxu0 %v316
    %380 = vmatpush1.bf16.msra.mxu0 %v315
    %381 = vmatprep.mubr.bf16.mxu0 %v144
    %382 = vmatmul.mubr.bf16.gmra.mrb[0].mxu0 %v143
    %v383 = vpop.f32.mrb[0].mxu0
    %v384 = vadd.f32 %v182, %v383
    %v385 = vpop.f32.mrb[0].mxu0
    %v386 = vadd.f32 %v186, %v385
    %v387 = vpop.f32.mrb[0].mxu0
    %v388 = vpop.f32.mrb[0].mxu0
    %389 = vdwg.mxu0
    %vm390 = vcmp.gt.f32.partialorder %v384, 0.0
    %vm391 = vcmp.gt.f32.partialorder %v386, 0.0
    %v392 = vmul.f32 %v384, 0.2
    %v393 = vmul.f32 %v386, 0.2
    %v394 = vsel %vm390, %v384, %v392
    %v395 = vsel %vm391, %v386, %v393
    %v396 = vld [vmem:[%s5] sm:$0x3]
    %v398 = vlaneseq
    %v399 = vshrl.u32 %v398, 7
    %v400 = vsub.s32 0, %v399
    %v401 = vrot.slane %v396, %v400
    %v402 = vlaneseq
    %v403 = vshrl.u32 %v402, 7
    %v404 = vsub.s32 1, %v403
    %v405 = vrot.slane %v396, %v404
    %v408 = vmul.f32 %v394, %v401
    %v409 = vmul.f32 %v395, %v405
    %v410 = vadd.f32 %v408, %v409
    %411 = vadd.xlane.f32.xlu0 %v410
    %v412 = vpop.xlane.xlu0 %411
    %v413 = vld [vmem:[#allocation2] sm:$0x1]
    %v415 = vlaneseq
    %v416 = vshrl.u32 %v415, 7
    %v417 = vsub.s32 0, %v416
    %v418 = vrot.slane %v413, %v417
    %v420 = vadd.f32 %v412, %v418
    %v421 = vmul.f32 %v420, 0.5
    %v422 = vtanh.pop %v421
    %v423 = vmul.f32 %v422, 0.5
    %v424 = vadd.f32 %v423, 0.5
    %vm425 = vcmask 7168
    %426 = vst.msk [vmem:[%s7] sm:$0xff] %vm425, %v424
    // Predicated region
    $region42: #{tpu_custom_call.1} parent=1 // pred_check
      _
    $region43: #{tpu_custom_call.1} parent=1 // pred_check_branch
      %428 = sbr.rel (0) target = $region45
    $region44: #{tpu_custom_call.1} parent=1 // pred_region
      _
    $region45: #{tpu_custom_call.1} parent=1 // pred_fallthru
      _
    // Predicated region
    $region46: #{tpu_custom_call.1} parent=1 // pred_check
      _
    $region47: #{tpu_custom_call.1} parent=1 // pred_check_branch
      %430 = sbr.rel (0) target = $region49
    $region48: #{tpu_custom_call.1} parent=1 // pred_region
      _
    $region49: #{tpu_custom_call.1} parent=1 // pred_fallthru
      _
    %431 = vsyncpa [#allocation4], 1
    %432 = vsyncpa [#allocation6], 1

</llo_original>
